<compile_context>
chip_gen: v7x
topology: tpu7x:2x2x1
jax: 0.10.0
libtpu: 0.0.40
codegen_flags: <defaults>
</compile_context>

<pallas_src>
import jax
import jax.numpy as jnp
from jax.experimental import pallas as pl
from jax.experimental.pallas import tpu as pltpu


def _round_up(x, m):
    return ((x + m - 1) // m) * m


def _fused_head_kernel(x_ref, w_ref, b_ref, out_ref):
    # x_ref: (tm, Cp) compute dtype, w_ref: (Cp, Op) compute dtype,
    # b_ref: (1, Op) f32, out_ref: (tm, Op) output dtype.
    acc = jnp.dot(x_ref[...], w_ref[...], preferred_element_type=jnp.float32)
    out_ref[...] = (acc + b_ref[...]).astype(out_ref.dtype)


def fast_rcnn_predictor(x, w_cls, b_cls, w_bbox, b_bbox, *,
                        tm=256, compute_dtype=jnp.bfloat16):
    """Forward pass of FastRCNNPredictor.

    Args:
      x:      (N, C) or (N, C, 1, 1)
      w_cls:  (C, num_classes)        -- transposed vs. torch's (out, in)
      b_cls:  (num_classes,)
      w_bbox: (C, 4*num_classes)
      b_bbox: (4*num_classes,)
      tm:     RoI-axis tile (rows per grid step); sweep 128/256/512.
      compute_dtype: matmul input dtype (bf16 default; f32 accumulation).
    Returns:
      (scores (N, num_classes), bbox_deltas (N, 4*num_classes))
    """
    if x.ndim == 4:
        assert x.shape[2] == 1 and x.shape[3] == 1, "expected spatial dims [1, 1]"
    x2 = x.reshape(x.shape[0], -1)                    # flatten(start_dim=1)

    n, c = x2.shape
    nc = w_cls.shape[1]
    nb = w_bbox.shape[1]
    out_dim = nc + nb
    out_dtype = x2.dtype

    lane = 128
    sub = 16 if compute_dtype == jnp.bfloat16 else 8

    # Padded / tiled sizes.
    c_pad = _round_up(c, lane)                        # contraction (lane dim of x)
    o_pad = _round_up(out_dim, lane)                  # fused lane-dense output width
    tm_eff = _round_up(min(tm, _round_up(n, sub)), sub)
    n_pad = _round_up(n, tm_eff)

    # Fuse the two heads; cast to compute dtype; zero-pad (padding never leaks:
    # padded W rows/cols are zero and outputs are sliced back below).
    w_fused = jnp.concatenate([w_cls, w_bbox], axis=1)            # (C, nc+nb)
    b_fused = jnp.concatenate([b_cls, b_bbox], axis=0)[None, :]   # (1, nc+nb)

    w_p = jnp.zeros((c_pad, o_pad), compute_dtype).at[:c, :out_dim].set(
        w_fused.astype(compute_dtype))
    b_p = jnp.zeros((1, o_pad), jnp.float32).at[:, :out_dim].set(
        b_fused.astype(jnp.float32))
    x_p = jnp.zeros((n_pad, c_pad), compute_dtype).at[:n, :c].set(
        x2.astype(compute_dtype))

    grid = (n_pad // tm_eff,)

    bytes_accessed = (x_p.size * x_p.dtype.itemsize
                      + w_p.size * w_p.dtype.itemsize
                      + b_p.size * b_p.dtype.itemsize
                      + n_pad * o_pad * jnp.dtype(out_dtype).itemsize)
    cost = pl.CostEstimate(flops=2 * n_pad * c_pad * o_pad,
                           transcendentals=0,
                           bytes_accessed=bytes_accessed)

    out = pl.pallas_call(
        _fused_head_kernel,
        out_shape=jax.ShapeDtypeStruct((n_pad, o_pad), out_dtype),
        grid=grid,
        in_specs=[
            pl.BlockSpec((tm_eff, c_pad), lambda i: (i, 0)),   # x tile (pipelined)
            pl.BlockSpec((c_pad, o_pad), lambda i: (0, 0)),    # fused W (resident)
            pl.BlockSpec((1, o_pad), lambda i: (0, 0)),        # fused bias (resident)
        ],
        out_specs=pl.BlockSpec((tm_eff, o_pad), lambda i: (i, 0)),
        compiler_params=pltpu.CompilerParams(
            dimension_semantics=("parallel",)),
        cost_estimate=cost,
    )(x_p, w_p, b_p)

    scores = out[:n, :nc]
    bbox_deltas = out[:n, nc:out_dim]
    return scores, bbox_deltas


def init_params(key, in_channels, num_classes):
    """Deterministic init matching torch.nn.Linear default:
    weight, bias ~ U(-1/sqrt(in_channels), 1/sqrt(in_channels))."""
    k_wc, k_bc, k_wb, k_bb = jax.random.split(key, 4)
    bound = 1.0 / jnp.sqrt(jnp.float32(in_channels))
    w_cls = jax.random.uniform(k_wc, (in_channels, num_classes),
                               jnp.float32, -bound, bound)
    b_cls = jax.random.uniform(k_bc, (num_classes,), jnp.float32, -bound, bound)
    w_bbox = jax.random.uniform(k_wb, (in_channels, num_classes * 4),
                                jnp.float32, -bound, bound)
    b_bbox = jax.random.uniform(k_bb, (num_classes * 4,), jnp.float32, -bound, bound)
    return w_cls, b_cls, w_bbox, b_bbox


if __name__ == "__main__":
    key = jax.random.PRNGKey(0)
    k_x, k_p = jax.random.split(key)

    batch = 8
    in_channels = 32
    num_classes = 5

    # 4-D input as produced by the RoI head (N, C, 1, 1), like the torch path.
    x = jax.random.normal(k_x, (batch, in_channels, 1, 1), dtype=jnp.float32)
    w_cls, b_cls, w_bbox, b_bbox = init_params(k_p, in_channels, num_classes)

    scores, bbox_deltas = fast_rcnn_predictor(x, w_cls, b_cls, w_bbox, b_bbox)
    jax.block_until_ready((scores, bbox_deltas))

    # Reference check in plain JAX (f32). bf16 matmul inputs loosen the tolerance.
    x2 = x.reshape(batch, -1)
    ref_scores = x2 @ w_cls + b_cls
    ref_bbox = x2 @ w_bbox + b_bbox
    assert scores.shape == (batch, num_classes)
    assert bbox_deltas.shape == (batch, num_classes * 4)
    assert jnp.allclose(scores, ref_scores, atol=5e-2, rtol=5e-2)
    assert jnp.allclose(bbox_deltas, ref_bbox, atol=5e-2, rtol=5e-2)

    print("KERNEL_OK")
</pallas_src>

<mosaic_0001>
module attributes {stable_mosaic.version = 11 : i64} {
  func.func @_fused_head_kernel(%arg0: i32, %arg1: memref<16x128xbf16, #tpu.memory_space<vmem>>, %arg2: memref<128x128xbf16, #tpu.memory_space<vmem>>, %arg3: memref<1x128xf32, #tpu.memory_space<vmem>>, %arg4: memref<16x128xf32, #tpu.memory_space<vmem>>) attributes {dimension_semantics = [#tpu.dimension_semantics<parallel>], iteration_bounds = array<i64: 1>, scalar_prefetch = 0 : i64, scratch_operands = 0 : i64, tpu.core_type = #tpu.core_type<tc>, window_params = [{transform_indices = @transform_0, window_bounds = array<i64: 16, 128>}, {pipeline_mode = #tpu.pipeline_mode<synchronous>, transform_indices = @transform_1, window_bounds = array<i64: 128, 128>}, {pipeline_mode = #tpu.pipeline_mode<synchronous>, transform_indices = @transform_2, window_bounds = array<i64: 1, 128>}, {transform_indices = @transform_3, window_bounds = array<i64: 16, 128>}]} {
    %c0 = arith.constant 0 : index
    %c0_0 = arith.constant 0 : index
    %0 = vector.load %arg1[%c0, %c0_0] : memref<16x128xbf16, #tpu.memory_space<vmem>>, vector<16x128xbf16>
    %c0_1 = arith.constant 0 : index
    %c0_2 = arith.constant 0 : index
    %1 = vector.load %arg2[%c0_1, %c0_2] : memref<128x128xbf16, #tpu.memory_space<vmem>>, vector<128x128xbf16>
    %cst = arith.constant dense<0.000000e+00> : vector<16x128xf32>
    %2 = tpu.matmul %0, %1, %cst {dimension_numbers = #tpu.dot_dimension_numbers<[1], [0], [0], [1], [0, 0, 1, 1], [], []>} : vector<16x128xbf16>, vector<128x128xbf16>, vector<16x128xf32> -> vector<16x128xf32>
    %c0_3 = arith.constant 0 : index
    %c0_4 = arith.constant 0 : index
    %3 = vector.load %arg3[%c0_3, %c0_4] : memref<1x128xf32, #tpu.memory_space<vmem>>, vector<1x128xf32>
    %4 = vector.broadcast %3 : vector<1x128xf32> to vector<16x128xf32>
    %5 = arith.addf %2, %4 : vector<16x128xf32>
    %c0_5 = arith.constant 0 : index
    %c0_6 = arith.constant 0 : index
    %6 = vector.load %arg4[%c0_5, %c0_6] : memref<16x128xf32, #tpu.memory_space<vmem>>, vector<16x128xf32>
    tpu.vector_store %arg4[%c0_5, %c0_6], %5 {strides = array<i32>} : memref<16x128xf32, #tpu.memory_space<vmem>>, vector<16x128xf32>,
    return
  }
  func.func @transform_0(%arg0: i32) -> (i32, i32) {
    %c0_i32 = arith.constant 0 : i32
    %c0_i32_0 = arith.constant 0 : i32
    return %arg0, %c0_i32 : i32, i32
  }
  func.func @transform_1(%arg0: i32) -> (i32, i32) {
    %c0_i32 = arith.constant 0 : i32
    %c0_i32_0 = arith.constant 0 : i32
    %c0_i32_1 = arith.constant 0 : i32
    return %c0_i32, %c0_i32_0 : i32, i32
  }
  func.func @transform_2(%arg0: i32) -> (i32, i32) {
    %c0_i32 = arith.constant 0 : i32
    %c0_i32_0 = arith.constant 0 : i32
    %c0_i32_1 = arith.constant 0 : i32
    return %c0_i32, %c0_i32_0 : i32, i32
  }
  func.func @transform_3(%arg0: i32) -> (i32, i32) {
    %c0_i32 = arith.constant 0 : i32
    %c0_i32_0 = arith.constant 0 : i32
    return %arg0, %c0_i32 : i32, i32
  }
}

</mosaic_0001>

<llo_original>
// kernel: tpu_custom_call.1
$region0: #{tpu_custom_call.1}
  #allocation0 [shape = 'u32[]', space=smem, size = 0x4, offset = 0x4, fixed_abs, tag = 'smem constant byte address 0x4 - core index']
  #allocation1 [shape = 'u32[144,128]{1,0:T(1,128)}', space=vmem, size = 0x12000, scoped, tag = 'internal scratch']
  %s0 = inlined_call_operand.hbm [shape: bf16[16,128], index: 0, kind: input, shape index: {}]
  %s1 = inlined_call_operand.hbm [shape: bf16[128,128], index: 1, kind: input, shape index: {}]
  %s2 = inlined_call_operand.vmem [shape: f32[1,128], index: 2, kind: input, shape index: {}]
  %s3 = inlined_call_operand.hbm [shape: f32[16,128], index: 3, kind: output, shape index: {}]
  %s4 = sld [smem:[#allocation0]]
  $region30: #{tpu_custom_call.1} parent=0
    _
  %s6 = ssub.s32 1, %s4
  %s7 = scalar_select 0, %s6, %s4
  $region1: #{tpu_custom_call.1} parent=0
    #allocation2 [shape = 'u8[4096]{0}', space=vmem, size = 0x1000, scoped, tag = 'input window, operand 0, single buffered']
    #allocation3 [shape = 's32[1]{0}', space=sflag, size = 0x4, scoped, tag = 'scoped memory for tpu_custom_call.1']
    #allocation4 [shape = 's32[1]{0}', space=sflag, size = 0x4, scoped, tag = 'scoped memory for tpu_custom_call.1']
    #allocation5 [shape = 'u8[32768]{0}', space=vmem, size = 0x8000, scoped, tag = 'input window, operand 1, single buffered']
    #allocation6 [shape = 's32[1]{0}', space=sflag, size = 0x4, scoped, tag = 'scoped memory for tpu_custom_call.1']
    #allocation7 [shape = 'u8[8192]{0}', space=vmem, size = 0x2000, scoped, tag = 'output window, operand 0, single buffered']
    %8 = vsyncpa [#allocation3], 0
    %9 = vsyncpa [#allocation6], 0
    %10 = vsyncpa [#allocation4], 0
    // Predicated region
    $region2: #{tpu_custom_call.1} parent=1 // pred_check
      _
    $region3: #{tpu_custom_call.1} parent=1 // pred_check_branch
      %12 = sbr.rel (0) target = $region5
    $region4: #{tpu_custom_call.1} parent=1 // pred_region
      %s14 = ssub.s32 128, 128
      %15 = vsyncadd [#allocation3], %s14
      %s16 = sshll.u32 [#allocation2], 4
      %s17 = int_to_ptr.vmem [resolvable:$true] %s16
      %22 = dma.hbm_to_vmem [thread:$0]  %s0, 128, %s17, [#allocation3], 64, 64, 4
    $region5: #{tpu_custom_call.1} parent=1 // pred_fallthru
      _
    // Predicated region
    $region6: #{tpu_custom_call.1} parent=1 // pred_check
      _
    $region7: #{tpu_custom_call.1} parent=1 // pred_check_branch
      %24 = sbr.rel (0) target = $region9
    $region8: #{tpu_custom_call.1} parent=1 // pred_region
      %s26 = ssub.s32 1024, 1024
      %27 = vsyncadd [#allocation6], %s26
      %s28 = sshll.u32 [#allocation5], 4
      %s29 = int_to_ptr.vmem [resolvable:$true] %s28
      %34 = dma.hbm_to_vmem [thread:$0]  %s1, 1024, %s29, [#allocation6], 64, 64, 4
    $region9: #{tpu_custom_call.1} parent=1 // pred_fallthru
      _
    // Predicated region
    $region10: #{tpu_custom_call.1} parent=1 // pred_check
      _
    $region11: #{tpu_custom_call.1} parent=1 // pred_check_branch
      %36 = sbr.rel (0) target = $region13
    $region12: #{tpu_custom_call.1} parent=1 // pred_region
      _
    $region13: #{tpu_custom_call.1} parent=1 // pred_fallthru
      _
    // Predicated region
    $region14: #{tpu_custom_call.1} parent=1 // pred_check
      _
    $region15: #{tpu_custom_call.1} parent=1 // pred_check_branch
      %38 = sbr.rel (0) target = $region17
    $region16: #{tpu_custom_call.1} parent=1 // pred_region
      %39 = dma.done [#allocation3], 128
    $region17: #{tpu_custom_call.1} parent=1 // pred_fallthru
      _
    // Predicated region
    $region18: #{tpu_custom_call.1} parent=1 // pred_check
      _
    $region19: #{tpu_custom_call.1} parent=1 // pred_check_branch
      %41 = sbr.rel (0) target = $region21
    $region20: #{tpu_custom_call.1} parent=1 // pred_region
      %42 = dma.done [#allocation6], 1024
    $region21: #{tpu_custom_call.1} parent=1 // pred_fallthru
      _
    %v44 = vld [vmem:[#allocation2] sm:$0xf]
    %v45 = vld [vmem:[#allocation2 + $0x4] sm:$0xf]
    %v46 = vld [vmem:[#allocation5] sm:$0xf]
    %v47 = vld [vmem:[#allocation5 + $0x4] sm:$0xf]
    %v48 = vld [vmem:[#allocation5 + $0x8] sm:$0xf]
    %v49 = vld [vmem:[#allocation5 + $0xc] sm:$0xf]
    %v50 = vld [vmem:[#allocation5 + $0x10] sm:$0xf]
    %v51 = vld [vmem:[#allocation5 + $0x14] sm:$0xf]
    %v52 = vld [vmem:[#allocation5 + $0x18] sm:$0xf]
    %v53 = vld [vmem:[#allocation5 + $0x1c] sm:$0xf]
    %v54 = vld [vmem:[#allocation5 + $0x20] sm:$0xf]
    %v55 = vld [vmem:[#allocation5 + $0x24] sm:$0xf]
    %v56 = vld [vmem:[#allocation5 + $0x28] sm:$0xf]
    %v57 = vld [vmem:[#allocation5 + $0x2c] sm:$0xf]
    %v58 = vld [vmem:[#allocation5 + $0x30] sm:$0xf]
    %v59 = vld [vmem:[#allocation5 + $0x34] sm:$0xf]
    %v60 = vld [vmem:[#allocation5 + $0x38] sm:$0xf]
    %v61 = vld [vmem:[#allocation5 + $0x3c] sm:$0xf]
    %v62 = vld [vmem:[%s2] sm:$0x1]
    %v64 = vlaneseq
    %v65 = vshrl.u32 %v64, 7
    %v66 = vsub.s32 0, %v65
    %v67 = vrot.slane %v62, %v66
    %v71 = vunpack.c.l.b16 %v44
    %v72 = vunpack.c.l.b16 %v45
    %v73 = vpack.c.b16 %v72, %v71
    %v91 = vunpack.c.l.b16 %v46
    %v92 = vunpack.c.l.b16 %v47
    %v93 = vunpack.c.l.b16 %v48
    %v94 = vunpack.c.l.b16 %v49
    %v95 = vunpack.c.l.b16 %v50
    %v96 = vunpack.c.l.b16 %v51
    %v97 = vunpack.c.l.b16 %v52
    %v98 = vunpack.c.l.b16 %v53
    %v99 = vunpack.c.l.b16 %v54
    %v100 = vunpack.c.l.b16 %v55
    %v101 = vunpack.c.l.b16 %v56
    %v102 = vunpack.c.l.b16 %v57
    %v103 = vunpack.c.l.b16 %v58
    %v104 = vunpack.c.l.b16 %v59
    %v105 = vunpack.c.l.b16 %v60
    %v106 = vunpack.c.l.b16 %v61
    %v107 = vpack.c.b16 %v92, %v91
    %v108 = vpack.c.b16 %v94, %v93
    %v109 = vpack.c.b16 %v96, %v95
    %v110 = vpack.c.b16 %v98, %v97
    %v111 = vpack.c.b16 %v100, %v99
    %v112 = vpack.c.b16 %v102, %v101
    %v113 = vpack.c.b16 %v104, %v103
    %v114 = vpack.c.b16 %v106, %v105
    %123 = vmatprep.subr.bf16.mxu0 0
    %124 = vmatpush1.bf16.msra.mxu0 %v107
    %125 = vmatprep.subr.bf16.mxu0 0
    %126 = vmatpush1.bf16.msra.mxu0 %v108
    %127 = vmatprep.subr.bf16.mxu0 0
    %128 = vmatpush1.bf16.msra.mxu0 %v109
    %129 = vmatprep.subr.bf16.mxu0 0
    %130 = vmatpush1.bf16.msra.mxu0 %v110
    %131 = vmatprep.subr.bf16.mxu0 0
    %132 = vmatpush1.bf16.msra.mxu0 %v111
    %133 = vmatprep.subr.bf16.mxu0 0
    %134 = vmatpush1.bf16.msra.mxu0 %v112
    %135 = vmatprep.subr.bf16.mxu0 0
    %136 = vmatpush1.bf16.msra.mxu0 %v113
    %137 = vmatprep.subr.bf16.mxu0 0
    %138 = vmatpush1.bf16.msra.mxu0 %v114
    %139 = vmatprep.subr.bf16.mxu0 0
    %140 = vmatpush1.bf16.msra.mxu0 0
    %141 = vmatprep.subr.bf16.mxu0 0
    %142 = vmatpush1.bf16.msra.mxu0 0
    %143 = vmatprep.subr.bf16.mxu0 0
    %144 = vmatpush1.bf16.msra.mxu0 0
    %145 = vmatprep.subr.bf16.mxu0 0
    %146 = vmatpush1.bf16.msra.mxu0 0
    %147 = vmatprep.subr.bf16.mxu0 0
    %148 = vmatpush1.bf16.msra.mxu0 0
    %149 = vmatprep.subr.bf16.mxu0 0
    %150 = vmatpush1.bf16.msra.mxu0 0
    %151 = vmatprep.subr.bf16.mxu0 0
    %152 = vmatpush1.bf16.msra.mxu0 0
    %153 = vmatprep.subr.bf16.mxu0 0
    %154 = vmatpush1.bf16.msra.mxu0 0
    %155 = vmatprep.mubr.bf16.mxu0 0
    %156 = vmatmul.mubr.bf16.gmra.mrb[0].mxu0 %v73
    %v157 = vpop.f32.mrb[0].mxu0
    %v158 = vadd.f32 %v67, %v157
    %v159 = vpop.f32.mrb[0].mxu0
    %v160 = vpop.f32.mrb[0].mxu0
    %v161 = vadd.f32 %v67, %v160
    %v162 = vpop.f32.mrb[0].mxu0
    %163 = vdwg.mxu0
    %164 = vst [vmem:[#allocation7] sm:$0xff] %v158
    %165 = vst [vmem:[#allocation7 + $0x8] sm:$0xff] %v161
    // Predicated region
    $region22: #{tpu_custom_call.1} parent=1 // pred_check
      _
    $region23: #{tpu_custom_call.1} parent=1 // pred_check_branch
      %167 = sbr.rel (0) target = $region25
    $region24: #{tpu_custom_call.1} parent=1 // pred_region
      %s169 = ssub.s32 256, 256
      %170 = vsyncadd [#allocation4], %s169
      %s171 = sshll.u32 [#allocation7], 4
      %s172 = int_to_ptr.vmem [resolvable:$true] %s171
      %177 = dma.vmem_to_hbm [thread:$0]  %s172, 256, %s3, [#allocation4], 128, 128, 8
    $region25: #{tpu_custom_call.1} parent=1 // pred_fallthru
      _
    // Predicated region
    $region26: #{tpu_custom_call.1} parent=1 // pred_check
      _
    $region27: #{tpu_custom_call.1} parent=1 // pred_check_branch
      %179 = sbr.rel (0) target = $region29
    $region28: #{tpu_custom_call.1} parent=1 // pred_region
      %180 = dma.done [#allocation4], 256
    $region29: #{tpu_custom_call.1} parent=1 // pred_fallthru
      _
    %181 = vsyncpa [#allocation3], 1
    %182 = vsyncpa [#allocation6], 1
    %183 = vsyncpa [#allocation4], 1

</llo_original>
